<compile_context>
chip_gen: v5e
topology: v5e:2x2
jax: 0.10.0
libtpu: 0.0.40
codegen_flags: <defaults>
</compile_context>

<pallas_src>
import jax
import jax.numpy as jnp
from jax.experimental import pallas as pl
from jax.experimental.pallas import tpu as pltpu


_INV_SQRT2 = 0.7071067811865476


def ffn_kernel(x_ref, w_ref, shift_ref, o_ref):
    # x_ref:     (BN, CP, TL)  BN samples per block; CP (possibly sample-packed)
    #                          channels on sublanes; spatial (H*W) on lanes.
    # w_ref:     (CP, CP)      BN-scale-folded (block-diagonal if packed) 1x1 weight.
    # shift_ref: (CP, 1)       folded shift = (conv_bias - mean) * scale + beta.
    # o_ref:     (BN, CP, TL)  output tile.
    w = w_ref[...]
    shift = shift_ref[...]
    # Short static unroll over the samples held in this block (BN is small).
    for b in range(x_ref.shape[0]):
        x = x_ref[b]                                                    # (CP, TL)
        # 1x1 conv over NCHW == (CP, CP) @ (CP, TL) matmul on the MXU.
        h = jnp.dot(w, x, preferred_element_type=jnp.float32)
        h = h + shift                                   # fused conv-bias + BN shift
        # exact GELU: 0.5 * h * (1 + erf(h / sqrt(2)))  (matches nn.GELU())
        h = 0.5 * h * (1.0 + jax.lax.erf(h * jnp.float32(_INV_SQRT2)))
        # residual add (requires hidden_features == in_features, as in the module)
        o_ref[b] = (h + x).astype(o_ref.dtype)


def ffn_forward(x_nchw, conv_w, conv_b, gamma, beta, running_mean, running_var,
                eps=1e-5, target_step_bytes=2 << 20):
    """x_nchw: (N, C, H, W) f32. conv_w: (Chid, C); other params: (Chid,)."""
    N, C, H, W = x_nchw.shape
    Chid = conv_w.shape[0]
    assert Chid == C, "residual add requires hidden_features == in_features"
    HW = H * W

    # ---- fold conv bias + BatchNorm (eval) into weight + per-channel shift ----
    scale = gamma / jnp.sqrt(running_var + eps)                       # (C,)
    w_folded = (conv_w * scale[:, None]).astype(jnp.float32)          # (C, C)
    shift = ((conv_b - running_mean) * scale + beta).astype(jnp.float32)

    # ---- sublane packing: for C < 8, pack G samples into the sublane dim ----
    G = 1
    if C < 8:
        g = 8 // C
        if g > 1 and N % g == 0:
            G = g
    NB = N // G
    CP = G * C
    x3d = x_nchw.reshape(NB, CP, HW)                 # contiguous -> free reshape
    if G > 1:
        w_use = jnp.kron(jnp.eye(G, dtype=jnp.float32), w_folded)     # block-diag (CP, CP)
        shift_use = jnp.tile(shift, G).reshape(CP, 1)
    else:
        w_use = w_folded
        shift_use = shift.reshape(CP, 1)

    # ---- tile selection, sized by HBM bytes moved per grid step (~2 MiB) ----
    bytes_per_lane = 8 * CP                    # 4 B read + 4 B write per channel
    tl_cap = max(128, (target_step_bytes // bytes_per_lane) // 128 * 128)
    if HW > tl_cap:
        BN, TL = 1, tl_cap                     # tile the lane axis, 1 sample/block
    else:
        TL = HW                                # whole spatial row per block
        max_bn = max(1, target_step_bytes // (bytes_per_lane * HW))
        BN = 1
        for cand in range(min(NB, max_bn), 0, -1):   # largest divisor of NB
            if NB % cand == 0:
                BN = cand
                break
    nb_blocks = NB // BN
    hw_blocks = pl.cdiv(HW, TL)

    # ---- generation-aware VMEM budget (~70% of per-core capacity) ----
    try:
        vmem_cap = int(pltpu.get_tpu_info().vmem_capacity_bytes)
    except Exception:
        vmem_cap = 64 << 20                    # v7x-sized fallback
    hard_cap = max(32 << 20, int(vmem_cap * 0.7))

    def _vmem_est(bn, tl):
        tile = 4 * bn * CP * tl                          # one f32 tile
        return 2 * (2 * tile) + 2 * 4 * CP * (CP + 1)    # dbl-buffered in/out + w/shift

    # Shrink the lane tile if (large-C) double-buffered tiles + weight overflow.
    while _vmem_est(BN, TL) > (hard_cap * 3) // 4 and TL >= 256:
        TL = max(128, ((TL // 2) + 127) // 128 * 128)
        hw_blocks = pl.cdiv(HW, TL)

    # Give megacore chips (v7x, 2 TCs) at least 2 parallel grid steps.
    if nb_blocks * hw_blocks == 1 and HW >= 256:
        TL = max(128, (((HW + 1) // 2) + 127) // 128 * 128)
        hw_blocks = pl.cdiv(HW, TL)

    vmem_limit = int(min(max(2 * _vmem_est(BN, TL), 32 << 20), hard_cap))

    out3d = pl.pallas_call(
        ffn_kernel,
        out_shape=jax.ShapeDtypeStruct((NB, CP, HW), x_nchw.dtype),
        grid_spec=pltpu.PrefetchScalarGridSpec(
            num_scalar_prefetch=0,
            grid=(nb_blocks, hw_blocks),
            in_specs=[
                pl.BlockSpec((BN, CP, TL), lambda i, j: (i, 0, j)),   # x tile
                pl.BlockSpec((CP, CP), lambda i, j: (0, 0)),          # weight (resident)
                pl.BlockSpec((CP, 1), lambda i, j: (0, 0)),           # shift  (resident)
            ],
            out_specs=pl.BlockSpec((BN, CP, TL), lambda i, j: (i, 0, j)),
        ),
        compiler_params=pltpu.CompilerParams(
            dimension_semantics=("parallel", "parallel"),
            vmem_limit_bytes=vmem_limit,
        ),
    )(x3d, w_use, shift_use)

    return out3d.reshape(N, C, H, W)


def _reference(x_nchw, w, b, gamma, beta, mean, var, eps=1e-5):
    # pure-JAX reference of the same math, NCHW
    h = jnp.einsum('nchw,oc->nohw', x_nchw, w,
                   precision=jax.lax.Precision.HIGHEST)
    h = h + b[None, :, None, None]
    h = (h - mean[None, :, None, None]) / jnp.sqrt(var[None, :, None, None] + eps)
    h = h * gamma[None, :, None, None] + beta[None, :, None, None]
    h = 0.5 * h * (1.0 + jax.lax.erf(h / jnp.sqrt(2.0)))
    return h + x_nchw


if __name__ == "__main__":
    # Small shapes consistent with the module: batch=2, channels=4, spatial=16
    N, C, H, W = 2, 4, 16, 16
    Chid = C  # hidden_features defaults to in_features

    key = jax.random.PRNGKey(0)
    kx, kw, kb, kg, kbe, km, kv = jax.random.split(key, 7)

    x = jax.random.normal(kx, (N, C, H, W), dtype=jnp.float32)

    # deterministic synthetic parameters (Conv2d 1x1 weight/bias, BN params/stats)
    conv_w = 0.1 * jax.random.normal(kw, (Chid, C), dtype=jnp.float32)
    conv_b = 0.1 * jax.random.normal(kb, (Chid,), dtype=jnp.float32)
    bn_gamma = 1.0 + 0.1 * jax.random.normal(kg, (Chid,), dtype=jnp.float32)
    bn_beta = 0.1 * jax.random.normal(kbe, (Chid,), dtype=jnp.float32)
    bn_mean = 0.1 * jax.random.normal(km, (Chid,), dtype=jnp.float32)
    bn_var = jnp.abs(1.0 + 0.1 * jax.random.normal(kv, (Chid,), dtype=jnp.float32))

    out = ffn_forward(x, conv_w, conv_b, bn_gamma, bn_beta, bn_mean, bn_var)
    out = jax.block_until_ready(out)

    ref = _reference(x, conv_w, conv_b, bn_gamma, bn_beta, bn_mean, bn_var)
    assert out.shape == (N, C, H, W)
    assert jnp.allclose(out, ref, atol=1e-4, rtol=1e-4)

    # TODO(synk): DropPath with drop_path > 0.0 (training-time stochastic depth)
    # is not implemented; the module default drop_path=0.0 is an Identity.
    # fc2 is defined in the module but never used in forward, so it is omitted.
    print("KERNEL_OK")
</pallas_src>

<mosaic_0001>
module attributes {stable_mosaic.version = 11 : i64} {
  func.func @ffn_kernel(%arg0: i32, %arg1: i32, %arg2: memref<1x8x128xf32, #tpu.memory_space<vmem>>, %arg3: memref<8x8xf32, #tpu.memory_space<vmem>>, %arg4: memref<8x1xf32, #tpu.memory_space<vmem>>, %arg5: memref<1x8x128xf32, #tpu.memory_space<vmem>>) attributes {dimension_semantics = [#tpu.dimension_semantics<parallel>, #tpu.dimension_semantics<parallel>], iteration_bounds = array<i64: 1, 2>, scalar_prefetch = 0 : i64, scratch_operands = 0 : i64, tpu.core_type = #tpu.core_type<tc>, window_params = [{transform_indices = @transform_0, window_bounds = array<i64: 1, 8, 128>}, {pipeline_mode = #tpu.pipeline_mode<synchronous>, transform_indices = @transform_1, window_bounds = array<i64: 8, 8>}, {pipeline_mode = #tpu.pipeline_mode<synchronous>, transform_indices = @transform_2, window_bounds = array<i64: 8, 1>}, {transform_indices = @transform_3, window_bounds = array<i64: 1, 8, 128>}]} {
    %c0 = arith.constant 0 : index
    %c0_0 = arith.constant 0 : index
    %0 = vector.load %arg3[%c0, %c0_0] : memref<8x8xf32, #tpu.memory_space<vmem>>, vector<8x8xf32>
    %c0_1 = arith.constant 0 : index
    %c0_2 = arith.constant 0 : index
    %1 = vector.load %arg4[%c0_1, %c0_2] : memref<8x1xf32, #tpu.memory_space<vmem>>, vector<8x1xf32>
    %c0_3 = arith.constant 0 : index
    %c0_4 = arith.constant 0 : index
    %c0_5 = arith.constant 0 : index
    %2 = vector.load %arg2[%c0_3, %c0_4, %c0_5] : memref<1x8x128xf32, #tpu.memory_space<vmem>>, vector<1x8x128xf32>
    %3 = vector.shape_cast %2 : vector<1x8x128xf32> to vector<8x128xf32>
    %cst = arith.constant dense<0.000000e+00> : vector<8x128xf32>
    %4 = tpu.matmul %0, %3, %cst {dimension_numbers = #tpu.dot_dimension_numbers<[1], [0], [0], [1], [0, 0, 1, 1], [], []>} : vector<8x8xf32>, vector<8x128xf32>, vector<8x128xf32> -> vector<8x128xf32>
    %5 = vector.broadcast %1 : vector<8x1xf32> to vector<8x128xf32>
    %6 = arith.addf %4, %5 : vector<8x128xf32>
    %cst_6 = arith.constant 5.000000e-01 : f32
    %7 = vector.broadcast %cst_6 : f32 to vector<8x128xf32>
    %8 = arith.mulf %7, %6 : vector<8x128xf32>
    %cst_7 = arith.constant 0.707106769 : f32
    %9 = vector.broadcast %cst_7 : f32 to vector<8x128xf32>
    %10 = arith.mulf %6, %9 : vector<8x128xf32>
    %11 = math.erf %10 : vector<8x128xf32>
    %cst_8 = arith.constant 1.000000e+00 : f32
    %12 = vector.broadcast %cst_8 : f32 to vector<8x128xf32>
    %13 = arith.addf %12, %11 : vector<8x128xf32>
    %14 = arith.mulf %8, %13 : vector<8x128xf32>
    %15 = arith.addf %14, %3 : vector<8x128xf32>
    %c0_9 = arith.constant 0 : index
    %c0_10 = arith.constant 0 : index
    %c0_11 = arith.constant 0 : index
    %16 = vector.load %arg5[%c0_9, %c0_10, %c0_11] : memref<1x8x128xf32, #tpu.memory_space<vmem>>, vector<1x8x128xf32>
    %17 = vector.shape_cast %16 : vector<1x8x128xf32> to vector<8x128xf32>
    %18 = vector.shape_cast %15 : vector<8x128xf32> to vector<1x8x128xf32>
    tpu.vector_store %arg5[%c0_9, %c0_10, %c0_11], %18 {strides = array<i32>} : memref<1x8x128xf32, #tpu.memory_space<vmem>>, vector<1x8x128xf32>,
    return
  }
  func.func @transform_0(%arg0: i32, %arg1: i32) -> (i32, i32, i32) {
    %c0_i32 = arith.constant 0 : i32
    %c0_i32_0 = arith.constant 0 : i32
    return %arg0, %c0_i32, %arg1 : i32, i32, i32
  }
  func.func @transform_1(%arg0: i32, %arg1: i32) -> (i32, i32) {
    %c0_i32 = arith.constant 0 : i32
    %c0_i32_0 = arith.constant 0 : i32
    %c0_i32_1 = arith.constant 0 : i32
    return %c0_i32, %c0_i32_0 : i32, i32
  }
  func.func @transform_2(%arg0: i32, %arg1: i32) -> (i32, i32) {
    %c0_i32 = arith.constant 0 : i32
    %c0_i32_0 = arith.constant 0 : i32
    %c0_i32_1 = arith.constant 0 : i32
    return %c0_i32, %c0_i32_0 : i32, i32
  }
  func.func @transform_3(%arg0: i32, %arg1: i32) -> (i32, i32, i32) {
    %c0_i32 = arith.constant 0 : i32
    %c0_i32_0 = arith.constant 0 : i32
    return %arg0, %c0_i32, %arg1 : i32, i32, i32
  }
}

</mosaic_0001>

<llo_original>
// kernel: tpu_custom_call.1
$region0: #{tpu_custom_call.1}
  #allocation0 [shape = 'u32[]', space=smem, size = 0x4, offset = 0x4, fixed_abs, tag = 'smem constant byte address 0x4 - core index']
  #allocation1 [shape = 'u32[72,128]{1,0:T(1,128)}', space=vmem, size = 0x9000, scoped, tag = 'internal scratch']
  %s0 = inlined_call_operand.hbm [shape: f32[1,8,256], index: 0, kind: input, shape index: {}]
  %s1 = inlined_call_operand.vmem [shape: f32[8,8], index: 1, kind: input, shape index: {}]
  %s2 = inlined_call_operand.vmem [shape: f32[8,1], index: 2, kind: input, shape index: {}]
  %s3 = inlined_call_operand.hbm [shape: f32[1,8,256], index: 3, kind: output, shape index: {}]
  %s4 = sld [smem:[#allocation0]]
  $region49: #{tpu_custom_call.1} parent=0
    _
  %s6 = ssub.s32 1, %s4
  %s7 = scalar_select 0, %s6, %s4
  $region1: #{tpu_custom_call.1} parent=0
    #allocation2 [shape = 'u8[8192]{0}', space=vmem, size = 0x2000, scoped, tag = 'input window, operand 0']
    #allocation3 [shape = 's32[2]{0}', space=sflag, size = 0x8, scoped, tag = 'scoped memory for tpu_custom_call.1']
    #allocation4 [shape = 's32[2]{0}', space=sflag, size = 0x8, scoped, tag = 'scoped memory for tpu_custom_call.1']
    #allocation5 [shape = 'u8[8192]{0}', space=vmem, size = 0x2000, scoped, tag = 'output window, operand 0']
    %8 = vsyncpa [#allocation3], 0
    %s9 = scalar_lea.sflag [#allocation3], 1
    %10 = vsyncpa %s9, 0
    %11 = vsyncpa [#allocation4], 0
    %s12 = scalar_lea.sflag [#allocation4], 1
    %13 = vsyncpa %s12, 0
    loop: start=0, step=1, limit=4
    $region2: #{tpu_custom_call.1} parent=1 // loop_pre_header
      _
    $region3: #{tpu_custom_call.1} parent=1 // loop_header
      %s15 = sphi 0, %s19
      %p16 = scmp.ge.s32.totalorder %s15, 4
      %s22 = sphi 0, %s34
      %s23 = sphi 0, %s30
      %s24 = sphi 0, %s22
      %s25 = sphi 0, %s23
      %s26 = sphi 0, %s24
      %s27 = sphi 0, %s25
      %s39 = sphi 0, %s41
      %s42 = sphi 0, %s39
      %s43 = sphi 0, %s42
      %s59 = sphi 0, %s43
      %s63 = sphi 0, %s63
      %s65 = sphi 0, %s63
      %s66 = sphi 0, %s65
      %s80 = sphi 0, %s66
      %s84 = sphi 0, %s84
      %s86 = sphi 0, %s84
      %s87 = sphi 0, %s86
      %s101 = sphi 0, %s87
      %s109 = sphi 0, %s111
      %s112 = sphi 0, %s109
      %s113 = sphi 0, %s112
      %s129 = sphi 0, %s113
    $region4: #{tpu_custom_call.1} parent=1 // loop_header_branch
      %18 = sbr.rel (%p16) target = $region8
    $region5: #{tpu_custom_call.1} parent=1 // loop_body
      %s20 = ssub.s32 %s15, 1
      %s21 = ssub.s32 %s15, 2
      %s28 = sadd.s32 1, %s23
      %p29 = scmp.ge.s32.totalorder %s28, 2
      %s30 = scalar_select %p29, 0, %s28
      %s31 = sadd.s32 1, %s22
      %s32 = scalar_select %p29, %s31, %s22
      %p33 = scmp.ge.s32.totalorder %s32, 1
      %s34 = scalar_select %p33, 0, %s32
      %s35 = ssub.s32 %s22, %s34
      %s36 = ssub.s32 %s23, %s30
      %s37 = sor.u32 %s35, %s36
      %p38 = scmp.eq.s32.totalorder %s37, 0
      %s40 = sadd.s32 %s39, 1
      %s41 = scalar_select %p38, %s39, %s40
      %p44 = pneg %p38
      %p45 = scmp.eq.s32.totalorder %s15, 1
      %p46 = por %p44, %p45
      %p47 = scmp.ne.s32.totalorder %s39, %s42
      %p48 = scmp.eq.s32.totalorder %s15, 0
      %p49 = por %p47, %p48
      %p50 = scmp.ne.s32.totalorder %s39, %s42
      %p51 = scmp.eq.s32.totalorder %s20, 1
      %p52 = por %p50, %p51
      %p53 = scmp.ne.s32.totalorder %s42, %s43
      %p54 = scmp.eq.s32.totalorder %s20, 0
      %p55 = por %p53, %p54
      %p56 = scmp.ne.s32.totalorder %s42, %s43
      %p57 = scmp.eq.s32.totalorder %s21, 1
      %p58 = por %p56, %p57
      %p60 = scmp.ne.s32.totalorder %s43, %s59
      %p61 = scmp.eq.s32.totalorder %s21, 0
      %p62 = por %p60, %p61
      %s64 = sadd.s32 %s63, 1
      %p67 = scmp.eq.s32.totalorder %s15, 1
      %p68 = scmp.ne.s32.totalorder %s63, %s65
      %p69 = scmp.eq.s32.totalorder %s15, 0
      %p70 = por %p68, %p69
      %p71 = scmp.ne.s32.totalorder %s63, %s65
      %p72 = scmp.eq.s32.totalorder %s20, 1
      %p73 = por %p71, %p72
      %p74 = scmp.ne.s32.totalorder %s65, %s66
      %p75 = scmp.eq.s32.totalorder %s20, 0
      %p76 = por %p74, %p75
      %p77 = scmp.ne.s32.totalorder %s65, %s66
      %p78 = scmp.eq.s32.totalorder %s21, 1
      %p79 = por %p77, %p78
      %p81 = scmp.ne.s32.totalorder %s66, %s80
      %p82 = scmp.eq.s32.totalorder %s21, 0
      %p83 = por %p81, %p82
      %s85 = sadd.s32 %s84, 1
      %p88 = scmp.eq.s32.totalorder %s15, 1
      %p89 = scmp.ne.s32.totalorder %s84, %s86
      %p90 = scmp.eq.s32.totalorder %s15, 0
      %p91 = por %p89, %p90
      %p92 = scmp.ne.s32.totalorder %s84, %s86
      %p93 = scmp.eq.s32.totalorder %s20, 1
      %p94 = por %p92, %p93
      %p95 = scmp.ne.s32.totalorder %s86, %s87
      %p96 = scmp.eq.s32.totalorder %s20, 0
      %p97 = por %p95, %p96
      %p98 = scmp.ne.s32.totalorder %s86, %s87
      %p99 = scmp.eq.s32.totalorder %s21, 1
      %p100 = por %p98, %p99
      %p102 = scmp.ne.s32.totalorder %s87, %s101
      %p103 = scmp.eq.s32.totalorder %s21, 0
      %p104 = por %p102, %p103
      %s105 = ssub.s32 %s22, %s34
      %s106 = ssub.s32 %s23, %s30
      %s107 = sor.u32 %s105, %s106
      %p108 = scmp.eq.s32.totalorder %s107, 0
      %s110 = sadd.s32 %s109, 1
      %s111 = scalar_select %p108, %s109, %s110
      %p114 = pneg %p108
      %p115 = scmp.eq.s32.totalorder %s15, 1
      %p116 = por %p114, %p115
      %p117 = scmp.ne.s32.totalorder %s109, %s112
      %p118 = scmp.eq.s32.totalorder %s15, 0
      %p119 = por %p117, %p118
      %p120 = scmp.ne.s32.totalorder %s109, %s112
      %p121 = scmp.eq.s32.totalorder %s20, 1
      %p122 = por %p120, %p121
      %p123 = scmp.ne.s32.totalorder %s112, %s113
      %p124 = scmp.eq.s32.totalorder %s20, 0
      %p125 = por %p123, %p124
      %p126 = scmp.ne.s32.totalorder %s112, %s113
      %p127 = scmp.eq.s32.totalorder %s21, 1
      %p128 = por %p126, %p127
      %p130 = scmp.ne.s32.totalorder %s113, %s129
      %p131 = scmp.eq.s32.totalorder %s21, 0
      %p132 = por %p130, %p131
      %p133 = scmp.le.s32.totalorder 1, %s15
      %p134 = scmp.lt.s32.totalorder %s15, 3
      %p135 = pnand %p133, %p134
      %p136 = pneg %p135
      // Predicated region
      $region9: #{tpu_custom_call.1} parent=5 // pred_check
        _
      $region10: #{tpu_custom_call.1} parent=5 // pred_check_branch
        %138 = sbr.rel (%p135) target = $region12
      $region11: #{tpu_custom_call.1} parent=5 // pred_region
        %s139 = ssub.s32 %s15, 1
        // Predicated region
        $region13: #{tpu_custom_call.1} parent=11 // pred_check
          %p140 = pneg %p76
        $region14: #{tpu_custom_call.1} parent=11 // pred_check_branch
          %142 = sbr.rel (%p140) target = $region16
        $region15: #{tpu_custom_call.1} parent=11 // pred_region
          _
        $region16: #{tpu_custom_call.1} parent=11 // pred_fallthru
          _
        // Predicated region
        $region17: #{tpu_custom_call.1} parent=11 // pred_check
          %p143 = pneg %p97
        $region18: #{tpu_custom_call.1} parent=11 // pred_check_branch
          %145 = sbr.rel (%p143) target = $region20
        $region19: #{tpu_custom_call.1} parent=11 // pred_region
          _
        $region20: #{tpu_custom_call.1} parent=11 // pred_fallthru
          _
      $region12: #{tpu_custom_call.1} parent=5 // pred_fallthru
        _
      %p146 = scmp.lt.s32.totalorder %s15, 2
      // Predicated region
      $region21: #{tpu_custom_call.1} parent=5 // pred_check
        %p147 = pneg %p146
      $region22: #{tpu_custom_call.1} parent=5 // pred_check_branch
        %149 = sbr.rel (%p147) target = $region24
      $region23: #{tpu_custom_call.1} parent=5 // pred_region
        // Predicated region
        $region25: #{tpu_custom_call.1} parent=23 // pred_check
          %p150 = pneg %p49
        $region26: #{tpu_custom_call.1} parent=23 // pred_check_branch
          %152 = sbr.rel (%p150) target = $region28
        $region27: #{tpu_custom_call.1} parent=23 // pred_region
          %s153 = sand.u32 %s39, 1
          %s154 = scalar_lea.sflag [#allocation3], %s153
          %s155 = sand.u32 %s39, 1
          %s156 = smul.addr %s155, 8
          %s157 = scalar_lea.vmem [#allocation2], %s156
          %159 = vsyncadd %s154, 0
          %s160 = smul.addr %s22, 2
          %s161 = sadd.s32 %s23, %s160
          %s162 = smul.addr %s161, 8
          %s163 = scalar_lea.hbm %s0, %s162
          %s165 = sshll.u32 %s163, 4
          %s166 = int_to_ptr.hbm [resolvable:$true] %s165
          %s167 = sshll.u32 %s157, 4
          %s168 = int_to_ptr.vmem [resolvable:$true] %s167
          %170 = dma.hbm_to_vmem [thread:$0]  %s166, 128, %s168, %s154
        $region28: #{tpu_custom_call.1} parent=23 // pred_fallthru
          _
      $region24: #{tpu_custom_call.1} parent=5 // pred_fallthru
        _
      %p171 = scmp.le.s32.totalorder 1, %s15
      %p172 = scmp.lt.s32.totalorder %s15, 3
      %p173 = pnand %p171, %p172
      %p174 = pneg %p173
      // Predicated region
      $region29: #{tpu_custom_call.1} parent=5 // pred_check
        _
      $region30: #{tpu_custom_call.1} parent=5 // pred_check_branch
        %176 = sbr.rel (%p173) target = $region32
      $region31: #{tpu_custom_call.1} parent=5 // pred_region
        %s177 = ssub.s32 %s15, 1
        %s178 = sand.u32 %s42, 1
        %s179 = scalar_lea.sflag [#allocation3], %s178
        %s180 = sand.u32 %s42, 1
        %s181 = smul.addr %s180, 8
        %s182 = scalar_lea.vmem [#allocation2], %s181
        // Predicated region
        $region33: #{tpu_custom_call.1} parent=31 // pred_check
          %p183 = pneg %p55
        $region34: #{tpu_custom_call.1} parent=31 // pred_check_branch
          %185 = sbr.rel (%p183) target = $region36
        $region35: #{tpu_custom_call.1} parent=31 // pred_region
          %187 = dma.done %s179, 128
        $region36: #{tpu_custom_call.1} parent=31 // pred_fallthru
          _
        %s188 = sand.u32 %s42, 1
        %s189 = scalar_lea.sflag [#allocation3], %s188
        %s190 = sand.u32 %s42, 1
        %s191 = smul.addr %s190, 8
        %s192 = scalar_lea.vmem [#allocation2], %s191
        %p193 = pneg %p55
        %p194 = pneg %p52
        %p195 = pneg %p76
        %p196 = pneg %p73
        %p197 = pneg %p97
        %p198 = pneg %p94
        %p199 = pneg %p125
        %p200 = pneg %p122
        %s201 = sand.u32 %s112, 1
        %s202 = scalar_lea.sflag [#allocation4], %s201
        %s203 = sand.u32 %s112, 1
        %s204 = smul.addr %s203, 8
        %s205 = scalar_lea.vmem [#allocation5], %s204
        %v206 = vld [vmem:[%s1] sm:$0xff]
        %v207 = vld [vmem:[%s2] sm:$0xff]
        %v208 = vld [vmem:[%s182] sm:$0xff]
        %210 = vset.pattern.permute.xlu0 0
        %211 = vperm.xlu0 %210, %v207
        %v212 = vpop.permute.xlu0 %211
        %vm214 = vcmask 64512
        %v216 = vsel %vm214, %v206, 0
        %218 = vmatpush.msra.mxu0 0.0
        %219 = vmatpush.msra.mxu0 0.0
        %220 = vmatpush.msra.mxu0 0.0
        %221 = vmatpush.msra.mxu0 0.0
        %222 = vmatpush.msra.mxu0 0.0
        %223 = vmatpush.msra.mxu0 0.0
        %224 = vmatpush.msra.mxu0 0.0
        %225 = vmatpush.msra.mxu0 0.0
        %226 = vmatpush.msra.mxu0 0.0
        %227 = vmatpush.msra.mxu0 0.0
        %228 = vmatpush.msra.mxu0 0.0
        %229 = vmatpush.msra.mxu0 0.0
        %230 = vmatpush.msra.mxu0 0.0
        %231 = vmatpush.msra.mxu0 0.0
        %232 = vmatpush.msra.mxu0 0.0
        %233 = vmatpush.msra.mxu0 %v208
        %234 = vmatmul.f32.gmra.mxu0 %v216
        %v235 = vpop.f32.mrf.mxu0
        %v236 = vadd.f32 %v212, %v235
        %237 = vdwg.mxu0
        %v238 = vmul.f32 %v236, 0.5
        %v239 = vmul.f32 %v236, 0.70710677
        %v240 = vmul.f32 %v239, %v239
        %v241 = vmin.f32 16.0, %v240
        %v242 = vmul.f32 %v241, 2.1237322e-06
        %v243 = vadd.f32 %v242, 0.00028619796
        %v244 = vmul.f32 %v241, %v243
        %v245 = vadd.f32 %v244, 0.0036580483
        %v246 = vmul.f32 %v241, %v245
        %v247 = vadd.f32 %v246, 0.05243302
        %v248 = vmul.f32 %v241, %v247
        %v249 = vadd.f32 %v248, 0.18741608
        %v250 = vmul.f32 %v241, %v249
        %v251 = vadd.f32 %v250, 1.1283791
        %v252 = vmul.f32 %v239, %v251
        %v253 = vmul.f32 %v241, 3.8918573e-05
        %v254 = vadd.f32 %v253, 0.001143296
        %v255 = vmul.f32 %v241, %v254
        %v256 = vadd.f32 %v255, 0.014752088
        %v257 = vmul.f32 %v241, %v256
        %v258 = vadd.f32 %v257, 0.112945676
        %v259 = vmul.f32 %v241, %v258
        %v260 = vadd.f32 %v259, 0.4994258
        %v261 = vmul.f32 %v241, %v260
        %v262 = vadd.f32 %v261, 1.0
        %v263 = vrcp.pop %v262
        %v264 = vmul.f32 %v262, %v263
        %v265 = vsub.f32 1.0, %v264
        %v266 = vmul.f32 %v263, %v265
        %v267 = vadd.f32 %v263, %v266
        %vm268 = vweird.f32 %v262
        %vm269 = vweird.f32 %v263
        %vm270 = vmor %vm268, %vm269
        %v271 = vsel %vm270, %v263, %v267
        %v272 = vand.u32 2147483647, %v262
        %vm273 = vcmp.eq.f32.partialorder %v272, 8.507059e+37
        %v274 = vand.u32 %v262, 2147483648
        %v275 = vor.u32 1.1754944e-38, %v274
        %v276 = vsel %vm273, %v275, %v271
        %v277 = vmul.f32 %v252, %v276
        %v278 = vmin.f32 %v277, 1.0
        %v279 = vmax.f32 %v278, -1.0
        %v280 = vadd.f32 %v279, 1.0
        %v281 = vmul.f32 %v238, %v280
        %v282 = vadd.f32 %v281, %v208
        %283 = vst [vmem:[%s205] sm:$0xff] %v282
        %s284 = sand.u32 %s112, 1
        %s285 = scalar_lea.sflag [#allocation4], %s284
        %s286 = sand.u32 %s112, 1
        %s287 = smul.addr %s286, 8
        %s288 = scalar_lea.vmem [#allocation5], %s287
        // Predicated region
        $region37: #{tpu_custom_call.1} parent=31 // pred_check
          %p289 = pneg %p122
        $region38: #{tpu_custom_call.1} parent=31 // pred_check_branch
          %291 = sbr.rel (%p289) target = $region40
        $region39: #{tpu_custom_call.1} parent=31 // pred_region
          %293 = vsyncadd %s285, 0
          %s294 = smul.addr %s24, 2
          %s295 = sadd.s32 %s25, %s294
          %s296 = smul.addr %s295, 8
          %s297 = scalar_lea.hbm %s3, %s296
          %s299 = sshll.u32 %s288, 4
          %s300 = int_to_ptr.vmem [resolvable:$true] %s299
          %s301 = sshll.u32 %s297, 4
          %s302 = int_to_ptr.hbm [resolvable:$true] %s301
          %304 = dma.vmem_to_hbm [thread:$0]  %s300, 128, %s302, %s285
        $region40: #{tpu_custom_call.1} parent=31 // pred_fallthru
          _
      $region32: #{tpu_custom_call.1} parent=5 // pred_fallthru
        _
      %p305 = scmp.le.s32.totalorder 2, %s15
      // Predicated region
      $region41: #{tpu_custom_call.1} parent=5 // pred_check
        %p306 = pneg %p305
      $region42: #{tpu_custom_call.1} parent=5 // pred_check_branch
        %308 = sbr.rel (%p306) target = $region44
      $region43: #{tpu_custom_call.1} parent=5 // pred_region
        %s309 = ssub.s32 %s15, 2
        // Predicated region
        $region45: #{tpu_custom_call.1} parent=43 // pred_check
          %p310 = pneg %p128
        $region46: #{tpu_custom_call.1} parent=43 // pred_check_branch
          %312 = sbr.rel (%p310) target = $region48
        $region47: #{tpu_custom_call.1} parent=43 // pred_region
          %s313 = sand.u32 %s113, 1
          %s314 = scalar_lea.sflag [#allocation4], %s313
          %s315 = sand.u32 %s113, 1
          %s316 = smul.addr %s315, 8
          %s317 = scalar_lea.vmem [#allocation5], %s316
          %319 = dma.done %s314, 128
        $region48: #{tpu_custom_call.1} parent=43 // pred_fallthru
          _
      $region44: #{tpu_custom_call.1} parent=5 // pred_fallthru
        _
    $region6: #{tpu_custom_call.1} parent=1 // loop_footer
      %s19 = sadd.s32 1, %s15
    $region7: #{tpu_custom_call.1} parent=1 // loop_footer_branch
      %14 = sbr.rel target = $region3
    $region8: #{tpu_custom_call.1} parent=1 // loop_exit
      _
    %320 = vsyncpa [#allocation3], 1
    %s321 = scalar_lea.sflag [#allocation3], 1
    %322 = vsyncpa %s321, 1
    %323 = vsyncpa [#allocation4], 1
    %s324 = scalar_lea.sflag [#allocation4], 1
    %325 = vsyncpa %s324, 1

</llo_original>
